<compile_context>
chip_gen: v5e
topology: v5e:2x2
jax: 0.10.0
libtpu: 0.0.40
codegen_flags: <defaults>
</compile_context>

<pallas_src>
import functools

import jax
import jax.numpy as jnp
from jax import lax
from jax.experimental import pallas as pl
from jax.experimental.pallas import tpu as pltpu

LANES = 128
SUBLANES = 8
NUM_CORES = 2                      # "parallel" leading grid axis (v7x dual-TC)
DEFAULT_BLOCK_ROWS = 1024          # (1024,128) f32 block = 512 KiB per input
ROW_ALIGN_ELEMS = SUBLANES * LANES  # 1024: keeps rows a multiple of 8


def _cdiv(a, b):
    return -(-a // b)


def _round_up(x, m):
    return ((x + m - 1) // m) * m


def _focal_kernel(x_ref, t_ref, o_ref, *, gamma, eps, n_valid, block_rows,
                  blocks_per_core):
    c = pl.program_id(0)   # core / output-row axis ("parallel")
    i = pl.program_id(1)   # block axis ("arbitrary", carried accumulator)

    # Output block index depends only on c -> the (1,8,128) block stays
    # resident in VMEM across the whole i sweep and acts as the accumulator.
    @pl.when(i == 0)
    def _():
        o_ref[...] = jnp.zeros_like(o_ref)

    x = x_ref[...].astype(jnp.float32)
    t = t_ref[...].astype(jnp.float32)

    # FocalLoss math (matches torch exactly, f32 compute).
    x = jnp.clip(x, jnp.float32(eps), jnp.float32(1.0 - eps))
    log_x = jnp.log(x)
    log_1mx = jnp.log(1.0 - x)

    if float(gamma) == 2.0:                      # default: squares on the VPU
        one_m_x = 1.0 - x
        pow_1mx = one_m_x * one_m_x
        pow_x = x * x
    elif float(gamma) == 0.0:
        pow_1mx = jnp.float32(1.0)
        pow_x = jnp.float32(1.0)
    else:                                        # general gamma: reuse the logs
        pow_1mx = jnp.exp(jnp.float32(gamma) * log_1mx)
        pow_x = jnp.exp(jnp.float32(gamma) * log_x)

    loss = -(t * pow_1mx * log_x + (1.0 - t) * pow_x * log_1mx)

    # Mask padded / out-of-range elements by *global* flattened index, so no
    # HBM-side padding values can ever contribute (clamped duplicate blocks on
    # the second core and the ragged tail all land here). VALU has slack.
    block_idx = c * blocks_per_core + i          # UNclamped grid-step index
    row_start = block_idx * block_rows
    row_io = lax.broadcasted_iota(jnp.int32, loss.shape, 0)
    lane_io = lax.broadcasted_iota(jnp.int32, loss.shape, 1)
    gidx = (row_start + row_io) * LANES + lane_io
    loss = jnp.where(gidx < n_valid, loss, jnp.float32(0.0))

    # Per-lane partial sums: (block_rows,128) -> (8,128) via vreg-wise adds.
    partial = jnp.sum(loss.reshape(block_rows // SUBLANES, SUBLANES, LANES),
                      axis=0)
    o_ref[...] = o_ref[...] + partial.reshape(1, SUBLANES, LANES)


def focal_loss(inputs, target, *, gamma=2, eps=1e-3,
               block_rows=DEFAULT_BLOCK_ROWS):
    """Mean focal loss; matches FocalLoss(gamma)(inputs, target) from the spec."""
    assert inputs.shape == target.shape
    n_elems = int(inputs.size)

    # Glue: flatten to a lane-dense (rows, 128) slab in the NATIVE dtype
    # (no up-cast in HBM; the f32 cast happens in-kernel under the DMA).
    x = inputs.reshape(-1)
    t = target.reshape(-1)

    # Only pad when the element count is not a multiple of 8*128 (keeps the
    # sublane dim 8-aligned). Padded values are masked in-kernel, so their
    # contents are irrelevant. Typical NCHW tensors need no copy at all.
    pad = (-n_elems) % ROW_ALIGN_ELEMS
    if pad:
        x = jnp.concatenate([x, jnp.full((pad,), 0.5, x.dtype)])
        t = jnp.concatenate([t, jnp.zeros((pad,), t.dtype)])

    rows = (n_elems + pad) // LANES
    x2 = x.reshape(rows, LANES)
    t2 = t.reshape(rows, LANES)

    br = min(_round_up(int(block_rows), SUBLANES), rows)   # multiple of 8, <= rows
    total_blocks = _cdiv(rows, br)
    blocks_per_core = _cdiv(total_blocks, NUM_CORES)
    grid = (NUM_CORES, blocks_per_core)
    last_block = total_blocks - 1

    def in_map(c, i):
        # Clamp so the DMA never starts past the array end; clamped duplicate
        # blocks contribute exactly zero via the in-kernel index mask.
        return (jnp.minimum(c * blocks_per_core + i, last_block), 0)

    kernel = functools.partial(
        _focal_kernel, gamma=float(gamma), eps=float(eps), n_valid=n_elems,
        block_rows=br, blocks_per_core=blocks_per_core)

    partials = pl.pallas_call(
        kernel,
        out_shape=jax.ShapeDtypeStruct((NUM_CORES, SUBLANES, LANES),
                                       jnp.float32),
        grid_spec=pltpu.PrefetchScalarGridSpec(
            num_scalar_prefetch=0,
            grid=grid,
            in_specs=[
                pl.BlockSpec((br, LANES), in_map),
                pl.BlockSpec((br, LANES), in_map),
            ],
            out_specs=pl.BlockSpec((1, SUBLANES, LANES),
                                   lambda c, i: (c, 0, 0)),
        ),
        compiler_params=pltpu.CompilerParams(
            dimension_semantics=("parallel", "arbitrary"),
        ),
    )(x2, t2)

    # Tiny epilogue: cross-lane reduce of 2*8*128 f32 partials + mean scale.
    return jnp.sum(partials) * jnp.float32(1.0 / n_elems)


def focal_loss_ref(inputs, target, gamma=2, eps=1e-3):
    x = jnp.clip(inputs.astype(jnp.float32), jnp.float32(eps),
                 jnp.float32(1.0 - eps))
    t = target.astype(jnp.float32)
    loss = -(t * (1.0 - x) ** gamma * jnp.log(x)
             + (1.0 - t) * x ** gamma * jnp.log(1.0 - x))
    return jnp.mean(loss)


if __name__ == "__main__":
    key = jax.random.PRNGKey(0)
    k1, k2 = jax.random.split(key)

    # Shapes consistent with the module's usage (per-pixel probabilities, NCHW).
    shape = (2, 4, 16, 16)
    inputs = jax.random.uniform(k1, shape, jnp.float32)
    target = (jax.random.uniform(k2, shape, jnp.float32) > 0.5).astype(
        jnp.float32)

    loss = focal_loss(inputs, target)
    jax.block_until_ready(loss)

    ref = focal_loss_ref(inputs, target)
    assert jnp.allclose(loss, ref, atol=1e-5, rtol=1e-5), (loss, ref)

    print("KERNEL_OK")
</pallas_src>

<mosaic_0001>
module attributes {stable_mosaic.version = 11 : i64} {
  func.func @_focal_kernel(%arg0: i32, %arg1: i32, %arg2: memref<16x128xf32, #tpu.memory_space<vmem>>, %arg3: memref<16x128xf32, #tpu.memory_space<vmem>>, %arg4: memref<1x8x128xf32, #tpu.memory_space<vmem>>) attributes {dimension_semantics = [#tpu.dimension_semantics<parallel>, #tpu.dimension_semantics<arbitrary>], iteration_bounds = array<i64: 2, 1>, scalar_prefetch = 0 : i64, scratch_operands = 0 : i64, tpu.core_type = #tpu.core_type<tc>, window_params = [{transform_indices = @transform_0, window_bounds = array<i64: 16, 128>}, {transform_indices = @transform_1, window_bounds = array<i64: 16, 128>}, {transform_indices = @transform_2, window_bounds = array<i64: 1, 8, 128>}]} {
    %c0_i32 = arith.constant 0 : i32
    %0 = arith.cmpi eq, %arg1, %c0_i32 : i32
    %1 = arith.extui %0 : i1 to i32
    %c0_i32_0 = arith.constant 0 : i32
    %2 = arith.cmpi ne, %1, %c0_i32_0 : i32
    scf.if %2 {
      %cst_17 = arith.constant 0.000000e+00 : f32
      %46 = vector.broadcast %cst_17 : f32 to vector<1x8x128xf32>
      %c0_18 = arith.constant 0 : index
      %c0_19 = arith.constant 0 : index
      %c0_20 = arith.constant 0 : index
      %47 = vector.load %arg4[%c0_18, %c0_19, %c0_20] : memref<1x8x128xf32, #tpu.memory_space<vmem>>, vector<1x8x128xf32>
      tpu.vector_store %arg4[%c0_18, %c0_19, %c0_20], %46 {strides = array<i32>} : memref<1x8x128xf32, #tpu.memory_space<vmem>>, vector<1x8x128xf32>,
    } else {
    }
    %c0 = arith.constant 0 : index
    %c0_1 = arith.constant 0 : index
    %3 = vector.load %arg2[%c0, %c0_1] : memref<16x128xf32, #tpu.memory_space<vmem>>, vector<16x128xf32>
    %c0_2 = arith.constant 0 : index
    %c0_3 = arith.constant 0 : index
    %4 = vector.load %arg3[%c0_2, %c0_3] : memref<16x128xf32, #tpu.memory_space<vmem>>, vector<16x128xf32>
    %cst = arith.constant 1.000000e-03 : f32
    %cst_4 = arith.constant 9.990000e-01 : f32
    %5 = vector.broadcast %cst : f32 to vector<16x128xf32>
    %6 = arith.maximumf %5, %3 : vector<16x128xf32>
    %7 = vector.broadcast %cst_4 : f32 to vector<16x128xf32>
    %8 = arith.minimumf %7, %6 : vector<16x128xf32>
    %9 = math.log %8 : vector<16x128xf32>
    %cst_5 = arith.constant 1.000000e+00 : f32
    %10 = vector.broadcast %cst_5 : f32 to vector<16x128xf32>
    %11 = arith.subf %10, %8 : vector<16x128xf32>
    %12 = math.log %11 : vector<16x128xf32>
    %cst_6 = arith.constant 1.000000e+00 : f32
    %13 = vector.broadcast %cst_6 : f32 to vector<16x128xf32>
    %14 = arith.subf %13, %8 : vector<16x128xf32>
    %15 = arith.mulf %14, %14 : vector<16x128xf32>
    %16 = arith.mulf %8, %8 : vector<16x128xf32>
    %17 = arith.mulf %4, %15 : vector<16x128xf32>
    %18 = arith.mulf %17, %9 : vector<16x128xf32>
    %cst_7 = arith.constant 1.000000e+00 : f32
    %19 = vector.broadcast %cst_7 : f32 to vector<16x128xf32>
    %20 = arith.subf %19, %4 : vector<16x128xf32>
    %21 = arith.mulf %20, %16 : vector<16x128xf32>
    %22 = arith.mulf %21, %12 : vector<16x128xf32>
    %23 = arith.addf %18, %22 : vector<16x128xf32>
    %cst_8 = arith.constant 0.000000e+00 : f32
    %24 = vector.broadcast %cst_8 : f32 to vector<16x128xf32>
    %25 = arith.subf %24, %23 : vector<16x128xf32>
    %c1_i32 = arith.constant 1 : i32
    %26 = arith.muli %arg0, %c1_i32 : i32
    %27 = arith.addi %26, %arg1 : i32
    %c16_i32 = arith.constant 16 : i32
    %28 = arith.muli %27, %c16_i32 : i32
    %29 = tpu.iota {dimensions = array<i32: 0>} : vector<16x128xi32>
    %30 = tpu.iota {dimensions = array<i32: 1>} : vector<16x128xi32>
    %31 = vector.broadcast %28 : i32 to vector<16x128xi32>
    %32 = arith.addi %31, %29 : vector<16x128xi32>
    %c128_i32 = arith.constant 128 : i32
    %33 = vector.broadcast %c128_i32 : i32 to vector<16x128xi32>
    %34 = arith.muli %32, %33 : vector<16x128xi32>
    %35 = arith.addi %34, %30 : vector<16x128xi32>
    %c2048_i32 = arith.constant 2048 : i32
    %36 = vector.broadcast %c2048_i32 : i32 to vector<16x128xi32>
    %37 = arith.cmpi slt, %35, %36 : vector<16x128xi32>
    %cst_9 = arith.constant 0.000000e+00 : f32
    %38 = vector.broadcast %cst_9 : f32 to vector<16x128xf32>
    %39 = arith.select %37, %25, %38 : vector<16x128xi1>, vector<16x128xf32>
    %40 = vector.shape_cast %39 : vector<16x128xf32> to vector<2x8x128xf32>
    %cst_10 = arith.constant dense<0.000000e+00> : vector<8x128xf32>
    %41 = vector.multi_reduction <add>, %40, %cst_10 [0] : vector<2x8x128xf32> to vector<8x128xf32>
    %c0_11 = arith.constant 0 : index
    %c0_12 = arith.constant 0 : index
    %c0_13 = arith.constant 0 : index
    %42 = vector.load %arg4[%c0_11, %c0_12, %c0_13] : memref<1x8x128xf32, #tpu.memory_space<vmem>>, vector<1x8x128xf32>
    %43 = vector.shape_cast %41 : vector<8x128xf32> to vector<1x8x128xf32>
    %44 = arith.addf %42, %43 : vector<1x8x128xf32>
    %c0_14 = arith.constant 0 : index
    %c0_15 = arith.constant 0 : index
    %c0_16 = arith.constant 0 : index
    %45 = vector.load %arg4[%c0_14, %c0_15, %c0_16] : memref<1x8x128xf32, #tpu.memory_space<vmem>>, vector<1x8x128xf32>
    tpu.vector_store %arg4[%c0_14, %c0_15, %c0_16], %44 {strides = array<i32>} : memref<1x8x128xf32, #tpu.memory_space<vmem>>, vector<1x8x128xf32>,
    return
  }
  func.func @transform_0(%arg0: i32, %arg1: i32) -> (i32, i32) {
    %c1_i32 = arith.constant 1 : i32
    %0 = arith.muli %arg0, %c1_i32 : i32
    %1 = arith.addi %0, %arg1 : i32
    %c0_i32 = arith.constant 0 : i32
    %2 = arith.minsi %1, %c0_i32 : i32
    %c0_i32_0 = arith.constant 0 : i32
    %c0_i32_1 = arith.constant 0 : i32
    return %2, %c0_i32_0 : i32, i32
  }
  func.func @transform_1(%arg0: i32, %arg1: i32) -> (i32, i32) {
    %c1_i32 = arith.constant 1 : i32
    %0 = arith.muli %arg0, %c1_i32 : i32
    %1 = arith.addi %0, %arg1 : i32
    %c0_i32 = arith.constant 0 : i32
    %2 = arith.minsi %1, %c0_i32 : i32
    %c0_i32_0 = arith.constant 0 : i32
    %c0_i32_1 = arith.constant 0 : i32
    return %2, %c0_i32_0 : i32, i32
  }
  func.func @transform_2(%arg0: i32, %arg1: i32) -> (i32, i32, i32) {
    %c0_i32 = arith.constant 0 : i32
    %c0_i32_0 = arith.constant 0 : i32
    %c0_i32_1 = arith.constant 0 : i32
    return %arg0, %c0_i32, %c0_i32_0 : i32, i32, i32
  }
}

</mosaic_0001>

<llo_original>
// kernel: tpu_custom_call.1
$region0: #{tpu_custom_call.1}
  #allocation0 [shape = 'u32[]', space=smem, size = 0x4, offset = 0x4, fixed_abs, tag = 'smem constant byte address 0x4 - core index']
  #allocation1 [shape = 'u32[72,128]{1,0:T(1,128)}', space=vmem, size = 0x9000, scoped, tag = 'internal scratch']
  %s0 = inlined_call_operand.hbm [shape: f32[16,128], index: 0, kind: input, shape index: {}]
  %s1 = inlined_call_operand.hbm [shape: f32[16,128], index: 1, kind: input, shape index: {}]
  %s2 = inlined_call_operand.hbm [shape: f32[2,8,128], index: 2, kind: output, shape index: {}]
  %s3 = sld [smem:[#allocation0]]
  $region53: #{tpu_custom_call.1} parent=0
    _
  %s5 = ssub.s32 1, %s3
  %s6 = scalar_select 0, %s5, %s3
  $region1: #{tpu_custom_call.1} parent=0
    #allocation2 [shape = 'u8[16384]{0}', space=vmem, size = 0x4000, scoped, tag = 'input window, operand 0']
    #allocation3 [shape = 's32[2]{0}', space=sflag, size = 0x8, scoped, tag = 'scoped memory for tpu_custom_call.1']
    #allocation4 [shape = 's32[2]{0}', space=sflag, size = 0x8, scoped, tag = 'scoped memory for tpu_custom_call.1']
    #allocation5 [shape = 'u8[16384]{0}', space=vmem, size = 0x4000, scoped, tag = 'input window, operand 1']
    #allocation6 [shape = 's32[2]{0}', space=sflag, size = 0x8, scoped, tag = 'scoped memory for tpu_custom_call.1']
    #allocation7 [shape = 'u8[8192]{0}', space=vmem, size = 0x2000, scoped, tag = 'output window, operand 0']
    %7 = vsyncpa [#allocation3], 0
    %s8 = scalar_lea.sflag [#allocation3], 1
    %9 = vsyncpa %s8, 0
    %10 = vsyncpa [#allocation6], 0
    %s11 = scalar_lea.sflag [#allocation6], 1
    %12 = vsyncpa %s11, 0
    %13 = vsyncpa [#allocation4], 0
    %s14 = scalar_lea.sflag [#allocation4], 1
    %15 = vsyncpa %s14, 0
    loop: start=0, step=1, limit=4
    $region2: #{tpu_custom_call.1} parent=1 // loop_pre_header
      _
    $region3: #{tpu_custom_call.1} parent=1 // loop_header
      %s17 = sphi 0, %s21
      %p18 = scmp.ge.s32.totalorder %s17, 4
      %s24 = sphi 0, %s36
      %s25 = sphi 0, %s32
      %s26 = sphi 0, %s24
      %s27 = sphi 0, %s25
      %s28 = sphi 0, %s26
      %s29 = sphi 0, %s27
      %s45 = sphi 0, %s47
      %s48 = sphi 0, %s45
      %s49 = sphi 0, %s48
      %s65 = sphi 0, %s49
      %s77 = sphi 0, %s79
      %s80 = sphi 0, %s77
      %s81 = sphi 0, %s80
      %s97 = sphi 0, %s81
      %s103 = sphi 0, %s105
      %s106 = sphi 0, %s103
      %s107 = sphi 0, %s106
      %s123 = sphi 0, %s107
    $region4: #{tpu_custom_call.1} parent=1 // loop_header_branch
      %20 = sbr.rel (%p18) target = $region8
    $region5: #{tpu_custom_call.1} parent=1 // loop_body
      %s22 = ssub.s32 %s17, 1
      %s23 = ssub.s32 %s17, 2
      %s30 = sadd.s32 1, %s25
      %p31 = scmp.ge.s32.totalorder %s30, 1
      %s32 = scalar_select %p31, 0, %s30
      %s33 = sadd.s32 1, %s24
      %s34 = scalar_select %p31, %s33, %s24
      %p35 = scmp.ge.s32.totalorder %s34, 2
      %s36 = scalar_select %p35, 0, %s34
      %s37 = sadd.s32 %s24, %s25
      %p38 = scmp.lt.s32.totalorder %s37, 0
      %s39 = scalar_select %p38, %s37, 0
      %s40 = sadd.s32 %s36, %s32
      %p41 = scmp.lt.s32.totalorder %s40, 0
      %s42 = scalar_select %p41, %s40, 0
      %s43 = ssub.s32 %s39, %s42
      %p44 = scmp.eq.s32.totalorder %s43, 0
      %s46 = sadd.s32 %s45, 1
      %s47 = scalar_select %p44, %s45, %s46
      %p50 = pneg %p44
      %p51 = scmp.eq.s32.totalorder %s17, 1
      %p52 = por %p50, %p51
      %p53 = scmp.ne.s32.totalorder %s45, %s48
      %p54 = scmp.eq.s32.totalorder %s17, 0
      %p55 = por %p53, %p54
      %p56 = scmp.ne.s32.totalorder %s45, %s48
      %p57 = scmp.eq.s32.totalorder %s22, 1
      %p58 = por %p56, %p57
      %p59 = scmp.ne.s32.totalorder %s48, %s49
      %p60 = scmp.eq.s32.totalorder %s22, 0
      %p61 = por %p59, %p60
      %p62 = scmp.ne.s32.totalorder %s48, %s49
      %p63 = scmp.eq.s32.totalorder %s23, 1
      %p64 = por %p62, %p63
      %p66 = scmp.ne.s32.totalorder %s49, %s65
      %p67 = scmp.eq.s32.totalorder %s23, 0
      %p68 = por %p66, %p67
      %s69 = sadd.s32 %s24, %s25
      %p70 = scmp.lt.s32.totalorder %s69, 0
      %s71 = scalar_select %p70, %s69, 0
      %s72 = sadd.s32 %s36, %s32
      %p73 = scmp.lt.s32.totalorder %s72, 0
      %s74 = scalar_select %p73, %s72, 0
      %s75 = ssub.s32 %s71, %s74
      %p76 = scmp.eq.s32.totalorder %s75, 0
      %s78 = sadd.s32 %s77, 1
      %s79 = scalar_select %p76, %s77, %s78
      %p82 = pneg %p76
      %p83 = scmp.eq.s32.totalorder %s17, 1
      %p84 = por %p82, %p83
      %p85 = scmp.ne.s32.totalorder %s77, %s80
      %p86 = scmp.eq.s32.totalorder %s17, 0
      %p87 = por %p85, %p86
      %p88 = scmp.ne.s32.totalorder %s77, %s80
      %p89 = scmp.eq.s32.totalorder %s22, 1
      %p90 = por %p88, %p89
      %p91 = scmp.ne.s32.totalorder %s80, %s81
      %p92 = scmp.eq.s32.totalorder %s22, 0
      %p93 = por %p91, %p92
      %p94 = scmp.ne.s32.totalorder %s80, %s81
      %p95 = scmp.eq.s32.totalorder %s23, 1
      %p96 = por %p94, %p95
      %p98 = scmp.ne.s32.totalorder %s81, %s97
      %p99 = scmp.eq.s32.totalorder %s23, 0
      %p100 = por %p98, %p99
      %s101 = ssub.s32 %s24, %s36
      %p102 = scmp.eq.s32.totalorder %s101, 0
      %s104 = sadd.s32 %s103, 1
      %s105 = scalar_select %p102, %s103, %s104
      %p108 = pneg %p102
      %p109 = scmp.eq.s32.totalorder %s17, 1
      %p110 = por %p108, %p109
      %p111 = scmp.ne.s32.totalorder %s103, %s106
      %p112 = scmp.eq.s32.totalorder %s17, 0
      %p113 = por %p111, %p112
      %p114 = scmp.ne.s32.totalorder %s103, %s106
      %p115 = scmp.eq.s32.totalorder %s22, 1
      %p116 = por %p114, %p115
      %p117 = scmp.ne.s32.totalorder %s106, %s107
      %p118 = scmp.eq.s32.totalorder %s22, 0
      %p119 = por %p117, %p118
      %p120 = scmp.ne.s32.totalorder %s106, %s107
      %p121 = scmp.eq.s32.totalorder %s23, 1
      %p122 = por %p120, %p121
      %p124 = scmp.ne.s32.totalorder %s107, %s123
      %p125 = scmp.eq.s32.totalorder %s23, 0
      %p126 = por %p124, %p125
      %p127 = scmp.le.s32.totalorder 1, %s17
      %p128 = scmp.lt.s32.totalorder %s17, 3
      %p129 = pnand %p127, %p128
      %p130 = pneg %p129
      // Predicated region
      $region9: #{tpu_custom_call.1} parent=5 // pred_check
        _
      $region10: #{tpu_custom_call.1} parent=5 // pred_check_branch
        %132 = sbr.rel (%p129) target = $region12
      $region11: #{tpu_custom_call.1} parent=5 // pred_region
        %s133 = ssub.s32 %s17, 1
      $region12: #{tpu_custom_call.1} parent=5 // pred_fallthru
        _
      %p134 = scmp.lt.s32.totalorder %s17, 2
      // Predicated region
      $region13: #{tpu_custom_call.1} parent=5 // pred_check
        %p135 = pneg %p134
      $region14: #{tpu_custom_call.1} parent=5 // pred_check_branch
        %137 = sbr.rel (%p135) target = $region16
      $region15: #{tpu_custom_call.1} parent=5 // pred_region
        // Predicated region
        $region17: #{tpu_custom_call.1} parent=15 // pred_check
          %p138 = pneg %p55
        $region18: #{tpu_custom_call.1} parent=15 // pred_check_branch
          %140 = sbr.rel (%p138) target = $region20
        $region19: #{tpu_custom_call.1} parent=15 // pred_region
          %s141 = sand.u32 %s45, 1
          %s142 = scalar_lea.sflag [#allocation3], %s141
          %s143 = sand.u32 %s45, 1
          %s144 = smul.addr %s143, 16
          %s145 = scalar_lea.vmem [#allocation2], %s144
          %s146 = sadd.s32 %s24, %s25
          %p147 = scmp.lt.s32.totalorder %s146, 0
          %s148 = scalar_select %p147, %s146, 0
          %s149 = smul.u32 2, %s148
          %151 = vsyncadd %s142, 0
          %s152 = smul.addr %s149, 8
          %s153 = scalar_lea.hbm %s0, %s152
          %s154 = sshll.u32 %s153, 4
          %s155 = int_to_ptr.hbm [resolvable:$true] %s154
          %s156 = sshll.u32 %s145, 4
          %s157 = int_to_ptr.vmem [resolvable:$true] %s156
          %162 = dma.hbm_to_vmem [thread:$0]  %s155, 256, %s157, %s142, 128, 128, 8
        $region20: #{tpu_custom_call.1} parent=15 // pred_fallthru
          _
        // Predicated region
        $region21: #{tpu_custom_call.1} parent=15 // pred_check
          %p163 = pneg %p87
        $region22: #{tpu_custom_call.1} parent=15 // pred_check_branch
          %165 = sbr.rel (%p163) target = $region24
        $region23: #{tpu_custom_call.1} parent=15 // pred_region
          %s166 = sand.u32 %s77, 1
          %s167 = scalar_lea.sflag [#allocation6], %s166
          %s168 = sand.u32 %s77, 1
          %s169 = smul.addr %s168, 16
          %s170 = scalar_lea.vmem [#allocation5], %s169
          %s171 = sadd.s32 %s24, %s25
          %p172 = scmp.lt.s32.totalorder %s171, 0
          %s173 = scalar_select %p172, %s171, 0
          %s174 = smul.u32 2, %s173
          %176 = vsyncadd %s167, 0
          %s177 = smul.addr %s174, 8
          %s178 = scalar_lea.hbm %s1, %s177
          %s179 = sshll.u32 %s178, 4
          %s180 = int_to_ptr.hbm [resolvable:$true] %s179
          %s181 = sshll.u32 %s170, 4
          %s182 = int_to_ptr.vmem [resolvable:$true] %s181
          %187 = dma.hbm_to_vmem [thread:$0]  %s180, 256, %s182, %s167, 128, 128, 8
        $region24: #{tpu_custom_call.1} parent=15 // pred_fallthru
          _
      $region16: #{tpu_custom_call.1} parent=5 // pred_fallthru
        _
      %p188 = scmp.le.s32.totalorder 1, %s17
      %p189 = scmp.lt.s32.totalorder %s17, 3
      %p190 = pnand %p188, %p189
      %p191 = pneg %p190
      // Predicated region
      $region25: #{tpu_custom_call.1} parent=5 // pred_check
        _
      $region26: #{tpu_custom_call.1} parent=5 // pred_check_branch
        %193 = sbr.rel (%p190) target = $region28
      $region27: #{tpu_custom_call.1} parent=5 // pred_region
        %s194 = ssub.s32 %s17, 1
        %s195 = sand.u32 %s48, 1
        %s196 = scalar_lea.sflag [#allocation3], %s195
        %s197 = sand.u32 %s48, 1
        %s198 = smul.addr %s197, 16
        %s199 = scalar_lea.vmem [#allocation2], %s198
        // Predicated region
        $region29: #{tpu_custom_call.1} parent=27 // pred_check
          %p200 = pneg %p61
        $region30: #{tpu_custom_call.1} parent=27 // pred_check_branch
          %202 = sbr.rel (%p200) target = $region32
        $region31: #{tpu_custom_call.1} parent=27 // pred_region
          %204 = dma.done %s196, 256
        $region32: #{tpu_custom_call.1} parent=27 // pred_fallthru
          _
        %s205 = sand.u32 %s80, 1
        %s206 = scalar_lea.sflag [#allocation6], %s205
        %s207 = sand.u32 %s80, 1
        %s208 = smul.addr %s207, 16
        %s209 = scalar_lea.vmem [#allocation5], %s208
        // Predicated region
        $region33: #{tpu_custom_call.1} parent=27 // pred_check
          %p210 = pneg %p93
        $region34: #{tpu_custom_call.1} parent=27 // pred_check_branch
          %212 = sbr.rel (%p210) target = $region36
        $region35: #{tpu_custom_call.1} parent=27 // pred_region
          %214 = dma.done %s206, 256
        $region36: #{tpu_custom_call.1} parent=27 // pred_fallthru
          _
        %s215 = sand.u32 %s48, 1
        %s216 = scalar_lea.sflag [#allocation3], %s215
        %s217 = sand.u32 %s48, 1
        %s218 = smul.addr %s217, 16
        %s219 = scalar_lea.vmem [#allocation2], %s218
        %p220 = pneg %p61
        %p221 = pneg %p58
        %s222 = sand.u32 %s80, 1
        %s223 = scalar_lea.sflag [#allocation6], %s222
        %s224 = sand.u32 %s80, 1
        %s225 = smul.addr %s224, 16
        %s226 = scalar_lea.vmem [#allocation5], %s225
        %p227 = pneg %p93
        %p228 = pneg %p90
        %p229 = pneg %p119
        %p230 = pneg %p116
        %s231 = sand.u32 %s106, 1
        %s232 = scalar_lea.sflag [#allocation4], %s231
        %s233 = sand.u32 %s106, 1
        %s234 = smul.addr %s233, 8
        %s235 = scalar_lea.vmem [#allocation7], %s234
        %s236 = sadd.s32 %s26, %s27
        %p237 = scmp.lt.s32.totalorder %s236, 0
        %s238 = scalar_select %p237, %s236, 0
        %s239 = smul.u32 2, %s238
        %s240 = sadd.s32 %s26, %s27
        %p241 = scmp.lt.s32.totalorder %s240, 0
        %s242 = scalar_select %p241, %s240, 0
        %s243 = smul.u32 2, %s242
        %p244 = scmp.eq.s32.totalorder %s27, 0
        // Predicated region
        $region37: #{tpu_custom_call.1} parent=27 // pred_check
          %p245 = pneg %p244
        $region38: #{tpu_custom_call.1} parent=27 // pred_check_branch
          %247 = sbr.rel (%p245) target = $region40
        $region39: #{tpu_custom_call.1} parent=27 // pred_region
          %248 = vst [vmem:[%s235] sm:$0xff] 0.0
        $region40: #{tpu_custom_call.1} parent=27 // pred_fallthru
          _
        %v249 = vld [vmem:[%s199] sm:$0xff]
        %v250 = vld [vmem:[%s199 + $0x8] sm:$0xff]
        %v251 = vld [vmem:[%s209] sm:$0xff]
        %v252 = vld [vmem:[%s209 + $0x8] sm:$0xff]
        %v253 = vmax.f32 %v249, 0.001
        %v254 = vmax.f32 %v250, 0.001
        %v255 = vmin.f32 %v253, 0.999
        %v256 = vmin.f32 %v254, 0.999
        %v257 = vlog2.pop %v255
        %v258 = vmul.f32 %v257, 0.6931472
        %v259 = vlog2.pop %v256
        %v260 = vmul.f32 %v259, 0.6931472
        %v261 = vsub.f32 1.0, %v255
        %v262 = vsub.f32 1.0, %v256
        %v263 = vlog2.pop %v261
        %v264 = vmul.f32 %v263, 0.6931472
        %v265 = vlog2.pop %v262
        %v266 = vmul.f32 %v265, 0.6931472
        %v267 = vmul.f32 %v261, %v261
        %v268 = vmul.f32 %v262, %v262
        %v269 = vmul.f32 %v255, %v255
        %v270 = vmul.f32 %v256, %v256
        %v271 = vmul.f32 %v251, %v267
        %v272 = vmul.f32 %v252, %v268
        %v273 = vmul.f32 %v271, %v258
        %v274 = vmul.f32 %v272, %v260
        %v275 = vsub.f32 1.0, %v251
        %v276 = vsub.f32 1.0, %v252
        %v277 = vmul.f32 %v275, %v269
        %v278 = vmul.f32 %v276, %v270
        %v279 = vmul.f32 %v277, %v264
        %v280 = vmul.f32 %v278, %v266
        %v281 = vadd.f32 %v273, %v279
        %v282 = vadd.f32 %v274, %v280
        %v283 = vsub.f32 0.0, %v281
        %v284 = vsub.f32 0.0, %v282
        %s285 = sadd.s32 %s26, %s27
        %s286 = smul.u32 %s285, 16
        %v287 = vlaneseq
        %v288 = vshrl.u32 %v287, 7
        %v289 = vadd.s32 %v288, 8
        %v290 = vlaneseq
        %v291 = vand.u32 %v290, 127
        %v292 = vstv %s286
        %v293 = vadd.s32 %v292, %v288
        %v294 = vadd.s32 %v292, %v289
        %v295 = vmul.u32 %v293, 128
        %v296 = vmul.u32 %v294, 128
        %v297 = vadd.s32 %v295, %v291
        %v298 = vadd.s32 %v296, %v291
        %vm299 = vcmp.lt.s32.totalorder %v297, 2048
        %vm300 = vcmp.lt.s32.totalorder %v298, 2048
        %v301 = vsel %vm299, %v283, 0.0
        %v302 = vsel %vm300, %v284, 0.0
        %v303 = vadd.f32 %v301, %v302
        %v304 = vld [vmem:[%s235] sm:$0xff]
        %v305 = vadd.f32 %v304, %v303
        %306 = vst [vmem:[%s235] sm:$0xff] %v305
        %s307 = sand.u32 %s106, 1
        %s308 = scalar_lea.sflag [#allocation4], %s307
        %s309 = sand.u32 %s106, 1
        %s310 = smul.addr %s309, 8
        %s311 = scalar_lea.vmem [#allocation7], %s310
        // Predicated region
        $region41: #{tpu_custom_call.1} parent=27 // pred_check
          %p312 = pneg %p116
        $region42: #{tpu_custom_call.1} parent=27 // pred_check_branch
          %314 = sbr.rel (%p312) target = $region44
        $region43: #{tpu_custom_call.1} parent=27 // pred_region
          %316 = vsyncadd %s308, 0
          %s317 = smul.addr %s26, 8
          %s318 = scalar_lea.hbm %s2, %s317
          %s320 = sshll.u32 %s311, 4
          %s321 = int_to_ptr.vmem [resolvable:$true] %s320
          %s322 = sshll.u32 %s318, 4
          %s323 = int_to_ptr.hbm [resolvable:$true] %s322
          %325 = dma.vmem_to_hbm [thread:$0]  %s321, 128, %s323, %s308
        $region44: #{tpu_custom_call.1} parent=27 // pred_fallthru
          _
      $region28: #{tpu_custom_call.1} parent=5 // pred_fallthru
        _
      %p326 = scmp.le.s32.totalorder 2, %s17
      // Predicated region
      $region45: #{tpu_custom_call.1} parent=5 // pred_check
        %p327 = pneg %p326
      $region46: #{tpu_custom_call.1} parent=5 // pred_check_branch
        %329 = sbr.rel (%p327) target = $region48
      $region47: #{tpu_custom_call.1} parent=5 // pred_region
        %s330 = ssub.s32 %s17, 2
        // Predicated region
        $region49: #{tpu_custom_call.1} parent=47 // pred_check
          %p331 = pneg %p122
        $region50: #{tpu_custom_call.1} parent=47 // pred_check_branch
          %333 = sbr.rel (%p331) target = $region52
        $region51: #{tpu_custom_call.1} parent=47 // pred_region
          %s334 = sand.u32 %s107, 1
          %s335 = scalar_lea.sflag [#allocation4], %s334
          %s336 = sand.u32 %s107, 1
          %s337 = smul.addr %s336, 8
          %s338 = scalar_lea.vmem [#allocation7], %s337
          %340 = dma.done %s335, 128
        $region52: #{tpu_custom_call.1} parent=47 // pred_fallthru
          _
      $region48: #{tpu_custom_call.1} parent=5 // pred_fallthru
        _
    $region6: #{tpu_custom_call.1} parent=1 // loop_footer
      %s21 = sadd.s32 1, %s17
    $region7: #{tpu_custom_call.1} parent=1 // loop_footer_branch
      %16 = sbr.rel target = $region3
    $region8: #{tpu_custom_call.1} parent=1 // loop_exit
      _
    %341 = vsyncpa [#allocation3], 1
    %s342 = scalar_lea.sflag [#allocation3], 1
    %343 = vsyncpa %s342, 1
    %344 = vsyncpa [#allocation6], 1
    %s345 = scalar_lea.sflag [#allocation6], 1
    %346 = vsyncpa %s345, 1
    %347 = vsyncpa [#allocation4], 1
    %s348 = scalar_lea.sflag [#allocation4], 1
    %349 = vsyncpa %s348, 1

</llo_original>
